<compile_context>
chip_gen: v5e
topology: v5e:2x2
jax: 0.10.0
libtpu: 0.0.40
codegen_flags: <defaults>
</compile_context>

<pallas_src>
import jax
import jax.numpy as jnp
from jax.experimental import pallas as pl
from jax.experimental.pallas import tpu as pltpu


def _fused_kernel(x_ref, wenc_ref, benc_ref, wdec_ref, bdec_ref, o_ref):
    # Encoder: one block-diagonal matmul == the three Linear heads.  ReLU is
    # elementwise, so applying it to the fused result is mathematically exact.
    h = jnp.maximum(
        jnp.dot(x_ref[...], wenc_ref[...], preferred_element_type=jnp.float32)
        + benc_ref[...], 0.0)
    # Decoder: h already *is* concat(h1, h2, h3) -> no in-kernel concatenate.
    o_ref[...] = (
        jnp.dot(h.astype(wdec_ref.dtype), wdec_ref[...],
                preferred_element_type=jnp.float32)
        + bdec_ref[...]).astype(o_ref.dtype)


def _pack_params(params, compute_dtype):
    """Pack the three encoder Linears into one block-diagonal weight."""
    We, be, Wk, bk, Wb, bb, Wd, bd = params
    Wenc = jax.scipy.linalg.block_diag(We, Wk, Wb).astype(compute_dtype)  # (Dx+Du+Dv, 3H)
    benc = jnp.concatenate([be, bk, bb], axis=1).astype(jnp.float32)      # (1, 3H)
    return Wenc, benc, Wd.astype(compute_dtype), bd.astype(jnp.float32)


def vae_in_out_model(x, u, v, params, *, tile_b=None,
                     compute_dtype=jnp.float32):
    """y = decoder(encoder(x, u, v)) with fused Pallas kernel (two MXU dots)."""
    Wenc, benc, Wd, bd = _pack_params(params, compute_dtype)
    xuv = jnp.concatenate([x, u, v], axis=1).astype(compute_dtype)  # wrapper-side (XLA) concat
    B, Din = xuv.shape
    Dout = Wd.shape[1]

    if tile_b is None:
        tile_b = B          # single grid step: whole problem is a few KB
    assert B % tile_b == 0
    grid = (B // tile_b,)

    full = lambda a: pl.BlockSpec(a.shape, lambda i: (0, 0))

    return pl.pallas_call(
        _fused_kernel,
        out_shape=jax.ShapeDtypeStruct((B, Dout), jnp.float32),
        grid=grid,
        in_specs=[
            pl.BlockSpec((tile_b, Din), lambda i: (i, 0)),
            full(Wenc), full(benc), full(Wd), full(bd),
        ],
        out_specs=pl.BlockSpec((tile_b, Dout), lambda i: (i, 0)),
        compiler_params=pltpu.CompilerParams(
            dimension_semantics=("parallel",)),
    )(xuv, Wenc, benc, Wd, bd)


def _reference(x, u, v, params, compute_dtype=jnp.float32):
    """Unfused reference: three Linear+ReLU heads, concat, Linear decoder."""
    We, be, Wk, bk, Wb, bb, Wd, bd = params
    dot = lambda a, w: jnp.dot(a.astype(compute_dtype), w.astype(compute_dtype),
                               preferred_element_type=jnp.float32)
    h1 = jnp.maximum(dot(x, We) + be, 0.0)
    h2 = jnp.maximum(dot(u, Wk) + bk, 0.0)
    h3 = jnp.maximum(dot(v, Wb) + bb, 0.0)
    h = jnp.concatenate([h1, h2, h3], axis=1)
    return dot(h, Wd) + bd


if __name__ == "__main__":
    # Small shapes implied by the forward: x = chroma-like features,
    # u = key one-hot, v = beat one-hot (flattened to [batch, features]).
    B, Dx, Du, Dv, H, Dout = 16, 32, 16, 8, 32, 16

    key = jax.random.PRNGKey(0)
    ks = jax.random.split(key, 12)
    x = jax.random.normal(ks[0], (B, Dx), jnp.float32)
    u = jax.random.normal(ks[1], (B, Du), jnp.float32)
    v = jax.random.normal(ks[2], (B, Dv), jnp.float32)

    scale = 0.1
    params = (
        scale * jax.random.normal(ks[3], (Dx, H), jnp.float32),        # encoder W
        scale * jax.random.normal(ks[4], (1, H), jnp.float32),         # encoder b
        scale * jax.random.normal(ks[5], (Du, H), jnp.float32),        # encoderKey W
        scale * jax.random.normal(ks[6], (1, H), jnp.float32),         # encoderKey b
        scale * jax.random.normal(ks[7], (Dv, H), jnp.float32),        # encoderBeat W
        scale * jax.random.normal(ks[8], (1, H), jnp.float32),         # encoderBeat b
        scale * jax.random.normal(ks[9], (3 * H, Dout), jnp.float32),  # decoder W
        scale * jax.random.normal(ks[10], (1, Dout), jnp.float32),     # decoder b
    )

    # f32 path (default): matches the PyTorch forward numerically.
    y = jax.block_until_ready(vae_in_out_model(x, u, v, params))
    y_ref = _reference(x, u, v, params)
    assert y.shape == (B, Dout)
    # Tolerance covers MXU accumulation-order differences between the fused
    # block-diagonal dot and the unfused reference dots.
    assert jnp.allclose(y, y_ref, atol=1e-3, rtol=1e-3)

    # bf16 operand path (v6e/v7x MXU), f32 accumulation.
    y_bf16 = jax.block_until_ready(
        vae_in_out_model(x, u, v, params, compute_dtype=jnp.bfloat16))
    y_ref_bf16 = _reference(x, u, v, params, compute_dtype=jnp.bfloat16)
    assert jnp.allclose(y_bf16, y_ref_bf16, atol=5e-2, rtol=5e-2)

    print("KERNEL_OK")
</pallas_src>

<mosaic_0001>
module attributes {stable_mosaic.version = 11 : i64} {
  func.func @_fused_kernel(%arg0: i32, %arg1: memref<16x56xf32, #tpu.memory_space<vmem>>, %arg2: memref<56x96xf32, #tpu.memory_space<vmem>>, %arg3: memref<1x96xf32, #tpu.memory_space<vmem>>, %arg4: memref<96x16xf32, #tpu.memory_space<vmem>>, %arg5: memref<1x16xf32, #tpu.memory_space<vmem>>, %arg6: memref<16x16xf32, #tpu.memory_space<vmem>>) attributes {dimension_semantics = [#tpu.dimension_semantics<parallel>], iteration_bounds = array<i64: 1>, scalar_prefetch = 0 : i64, scratch_operands = 0 : i64, tpu.core_type = #tpu.core_type<tc>, window_params = [{transform_indices = @transform_0, window_bounds = array<i64: 16, 56>}, {pipeline_mode = #tpu.pipeline_mode<synchronous>, transform_indices = @transform_1, window_bounds = array<i64: 56, 96>}, {pipeline_mode = #tpu.pipeline_mode<synchronous>, transform_indices = @transform_2, window_bounds = array<i64: 1, 96>}, {pipeline_mode = #tpu.pipeline_mode<synchronous>, transform_indices = @transform_3, window_bounds = array<i64: 96, 16>}, {pipeline_mode = #tpu.pipeline_mode<synchronous>, transform_indices = @transform_4, window_bounds = array<i64: 1, 16>}, {transform_indices = @transform_5, window_bounds = array<i64: 16, 16>}]} {
    %c0 = arith.constant 0 : index
    %c0_0 = arith.constant 0 : index
    %0 = vector.load %arg1[%c0, %c0_0] : memref<16x56xf32, #tpu.memory_space<vmem>>, vector<16x56xf32>
    %c0_1 = arith.constant 0 : index
    %c0_2 = arith.constant 0 : index
    %1 = vector.load %arg2[%c0_1, %c0_2] : memref<56x96xf32, #tpu.memory_space<vmem>>, vector<56x96xf32>
    %cst = arith.constant dense<0.000000e+00> : vector<16x96xf32>
    %2 = tpu.matmul %0, %1, %cst {dimension_numbers = #tpu.dot_dimension_numbers<[1], [0], [0], [1], [0, 0, 1, 1], [], []>} : vector<16x56xf32>, vector<56x96xf32>, vector<16x96xf32> -> vector<16x96xf32>
    %c0_3 = arith.constant 0 : index
    %c0_4 = arith.constant 0 : index
    %3 = vector.load %arg3[%c0_3, %c0_4] : memref<1x96xf32, #tpu.memory_space<vmem>>, vector<1x96xf32>
    %4 = vector.broadcast %3 : vector<1x96xf32> to vector<16x96xf32>
    %5 = arith.addf %2, %4 : vector<16x96xf32>
    %cst_5 = arith.constant 0.000000e+00 : f32
    %6 = vector.broadcast %cst_5 : f32 to vector<16x96xf32>
    %7 = arith.maximumf %5, %6 : vector<16x96xf32>
    %c0_6 = arith.constant 0 : index
    %c0_7 = arith.constant 0 : index
    %8 = vector.load %arg4[%c0_6, %c0_7] : memref<96x16xf32, #tpu.memory_space<vmem>>, vector<96x16xf32>
    %cst_8 = arith.constant dense<0.000000e+00> : vector<16x16xf32>
    %9 = tpu.matmul %7, %8, %cst_8 {dimension_numbers = #tpu.dot_dimension_numbers<[1], [0], [0], [1], [0, 0, 1, 1], [], []>} : vector<16x96xf32>, vector<96x16xf32>, vector<16x16xf32> -> vector<16x16xf32>
    %c0_9 = arith.constant 0 : index
    %c0_10 = arith.constant 0 : index
    %10 = vector.load %arg5[%c0_9, %c0_10] : memref<1x16xf32, #tpu.memory_space<vmem>>, vector<1x16xf32>
    %11 = vector.broadcast %10 : vector<1x16xf32> to vector<16x16xf32>
    %12 = arith.addf %9, %11 : vector<16x16xf32>
    %c0_11 = arith.constant 0 : index
    %c0_12 = arith.constant 0 : index
    %13 = vector.load %arg6[%c0_11, %c0_12] : memref<16x16xf32, #tpu.memory_space<vmem>>, vector<16x16xf32>
    tpu.vector_store %arg6[%c0_11, %c0_12], %12 {strides = array<i32>} : memref<16x16xf32, #tpu.memory_space<vmem>>, vector<16x16xf32>,
    return
  }
  func.func @transform_0(%arg0: i32) -> (i32, i32) {
    %c0_i32 = arith.constant 0 : i32
    %c0_i32_0 = arith.constant 0 : i32
    return %arg0, %c0_i32 : i32, i32
  }
  func.func @transform_1(%arg0: i32) -> (i32, i32) {
    %c0_i32 = arith.constant 0 : i32
    %c0_i32_0 = arith.constant 0 : i32
    %c0_i32_1 = arith.constant 0 : i32
    return %c0_i32, %c0_i32_0 : i32, i32
  }
  func.func @transform_2(%arg0: i32) -> (i32, i32) {
    %c0_i32 = arith.constant 0 : i32
    %c0_i32_0 = arith.constant 0 : i32
    %c0_i32_1 = arith.constant 0 : i32
    return %c0_i32, %c0_i32_0 : i32, i32
  }
  func.func @transform_3(%arg0: i32) -> (i32, i32) {
    %c0_i32 = arith.constant 0 : i32
    %c0_i32_0 = arith.constant 0 : i32
    %c0_i32_1 = arith.constant 0 : i32
    return %c0_i32, %c0_i32_0 : i32, i32
  }
  func.func @transform_4(%arg0: i32) -> (i32, i32) {
    %c0_i32 = arith.constant 0 : i32
    %c0_i32_0 = arith.constant 0 : i32
    %c0_i32_1 = arith.constant 0 : i32
    return %c0_i32, %c0_i32_0 : i32, i32
  }
  func.func @transform_5(%arg0: i32) -> (i32, i32) {
    %c0_i32 = arith.constant 0 : i32
    %c0_i32_0 = arith.constant 0 : i32
    return %arg0, %c0_i32 : i32, i32
  }
}

</mosaic_0001>

<llo_original>
// kernel: tpu_custom_call.1
$region0: #{tpu_custom_call.1}
  #allocation0 [shape = 'u32[]', space=smem, size = 0x4, offset = 0x4, fixed_abs, tag = 'smem constant byte address 0x4 - core index']
  #allocation1 [shape = 'u32[72,128]{1,0:T(1,128)}', space=vmem, size = 0x9000, scoped, tag = 'internal scratch']
  %s0 = inlined_call_operand.vmem [shape: f32[16,56], index: 0, kind: input, shape index: {}]
  %s1 = inlined_call_operand.vmem [shape: f32[56,96], index: 1, kind: input, shape index: {}]
  %s2 = inlined_call_operand.vmem [shape: f32[1,96], index: 2, kind: input, shape index: {}]
  %s3 = inlined_call_operand.vmem [shape: f32[96,16], index: 3, kind: input, shape index: {}]
  %s4 = inlined_call_operand.vmem [shape: f32[1,16], index: 4, kind: input, shape index: {}]
  %s5 = inlined_call_operand.hbm [shape: f32[16,16], index: 5, kind: output, shape index: {}]
  %s6 = sld [smem:[#allocation0]]
  $region30: #{tpu_custom_call.1} parent=0
    _
  %s8 = ssub.s32 1, %s6
  %s9 = scalar_select 0, %s8, %s6
  $region1: #{tpu_custom_call.1} parent=0
    #allocation2 [shape = 'u8[8192]{0}', space=vmem, size = 0x2000, scoped, tag = 'output window, operand 0, single buffered']
    #allocation3 [shape = 's32[1]{0}', space=sflag, size = 0x4, scoped, tag = 'scoped memory for tpu_custom_call.1']
    %10 = vsyncpa [#allocation3], 0
    // Predicated region
    $region2: #{tpu_custom_call.1} parent=1 // pred_check
      _
    $region3: #{tpu_custom_call.1} parent=1 // pred_check_branch
      %12 = sbr.rel (0) target = $region5
    $region4: #{tpu_custom_call.1} parent=1 // pred_region
      _
    $region5: #{tpu_custom_call.1} parent=1 // pred_fallthru
      _
    // Predicated region
    $region6: #{tpu_custom_call.1} parent=1 // pred_check
      _
    $region7: #{tpu_custom_call.1} parent=1 // pred_check_branch
      %14 = sbr.rel (0) target = $region9
    $region8: #{tpu_custom_call.1} parent=1 // pred_region
      _
    $region9: #{tpu_custom_call.1} parent=1 // pred_fallthru
      _
    // Predicated region
    $region10: #{tpu_custom_call.1} parent=1 // pred_check
      _
    $region11: #{tpu_custom_call.1} parent=1 // pred_check_branch
      %16 = sbr.rel (0) target = $region13
    $region12: #{tpu_custom_call.1} parent=1 // pred_region
      _
    $region13: #{tpu_custom_call.1} parent=1 // pred_fallthru
      _
    // Predicated region
    $region14: #{tpu_custom_call.1} parent=1 // pred_check
      _
    $region15: #{tpu_custom_call.1} parent=1 // pred_check_branch
      %18 = sbr.rel (0) target = $region17
    $region16: #{tpu_custom_call.1} parent=1 // pred_region
      _
    $region17: #{tpu_custom_call.1} parent=1 // pred_fallthru
      _
    // Predicated region
    $region18: #{tpu_custom_call.1} parent=1 // pred_check
      _
    $region19: #{tpu_custom_call.1} parent=1 // pred_check_branch
      %20 = sbr.rel (0) target = $region21
    $region20: #{tpu_custom_call.1} parent=1 // pred_region
      _
    $region21: #{tpu_custom_call.1} parent=1 // pred_fallthru
      _
    %v21 = vld [vmem:[%s0] sm:$0xff]
    %v22 = vld [vmem:[%s0 + $0x8] sm:$0xff]
    %v23 = vld [vmem:[%s1] sm:$0xff]
    %v24 = vld [vmem:[%s1 + $0x8] sm:$0xff]
    %v25 = vld [vmem:[%s1 + $0x10] sm:$0xff]
    %v26 = vld [vmem:[%s1 + $0x18] sm:$0xff]
    %v27 = vld [vmem:[%s1 + $0x20] sm:$0xff]
    %v28 = vld [vmem:[%s1 + $0x28] sm:$0xff]
    %v29 = vld [vmem:[%s1 + $0x30] sm:$0xff]
    %v30 = vld [vmem:[%s2] sm:$0x1]
    %v32 = vperm.slane %v30, 0
    %vm34 = vcmask 457728
    %v36 = vsel %vm34, %v21, 0
    %v39 = vsel %vm34, %v22, 0
    %41 = vmatpush.msra.mxu0 0.0
    %42 = vmatpush.msra.mxu0 0.0
    %43 = vmatpush.msra.mxu0 0.0
    %44 = vmatpush.msra.mxu0 0.0
    %45 = vmatpush.msra.mxu0 0.0
    %46 = vmatpush.msra.mxu0 0.0
    %47 = vmatpush.msra.mxu0 0.0
    %48 = vmatpush.msra.mxu0 0.0
    %49 = vmatpush.msra.mxu0 0.0
    %50 = vmatpush.msra.mxu0 %v29
    %51 = vmatpush.msra.mxu0 %v28
    %52 = vmatpush.msra.mxu0 %v27
    %53 = vmatpush.msra.mxu0 %v26
    %54 = vmatpush.msra.mxu0 %v25
    %55 = vmatpush.msra.mxu0 %v24
    %56 = vmatpush.msra.mxu0 %v23
    %57 = vmatmul.f32.gmra.mxu0 %v36
    %v58 = vpop.f32.mrf.mxu0
    %v59 = vadd.f32 %v32, %v58
    %60 = vmatmul.f32.gmra.mxu0 %v39
    %v61 = vpop.f32.mrf.mxu0
    %v62 = vadd.f32 %v32, %v61
    %63 = vdwg.mxu0
    %v64 = vmax.f32 %v59, 0.0
    %v65 = vmax.f32 %v62, 0.0
    %v66 = vld [vmem:[%s3] sm:$0xff]
    %v67 = vld [vmem:[%s3 + $0x8] sm:$0xff]
    %v68 = vld [vmem:[%s3 + $0x10] sm:$0xff]
    %v69 = vld [vmem:[%s3 + $0x18] sm:$0xff]
    %v70 = vld [vmem:[%s3 + $0x20] sm:$0xff]
    %v71 = vld [vmem:[%s3 + $0x28] sm:$0xff]
    %v72 = vld [vmem:[%s3 + $0x30] sm:$0xff]
    %v73 = vld [vmem:[%s3 + $0x38] sm:$0xff]
    %v74 = vld [vmem:[%s3 + $0x40] sm:$0xff]
    %v75 = vld [vmem:[%s3 + $0x48] sm:$0xff]
    %v76 = vld [vmem:[%s3 + $0x50] sm:$0xff]
    %v77 = vld [vmem:[%s3 + $0x58] sm:$0xff]
    %v78 = vld [vmem:[%s4] sm:$0x1]
    %v80 = vperm.slane %v78, 0
    %vm82 = vcmask 785408
    %v84 = vsel %vm82, %v64, 0
    %v87 = vsel %vm82, %v65, 0
    %89 = vmatpush.msra.mxu0 0.0
    %90 = vmatpush.msra.mxu0 0.0
    %91 = vmatpush.msra.mxu0 0.0
    %92 = vmatpush.msra.mxu0 0.0
    %93 = vmatpush.msra.mxu0 %v77
    %94 = vmatpush.msra.mxu0 %v76
    %95 = vmatpush.msra.mxu0 %v75
    %96 = vmatpush.msra.mxu0 %v74
    %97 = vmatpush.msra.mxu0 %v73
    %98 = vmatpush.msra.mxu0 %v72
    %99 = vmatpush.msra.mxu0 %v71
    %100 = vmatpush.msra.mxu0 %v70
    %101 = vmatpush.msra.mxu0 %v69
    %102 = vmatpush.msra.mxu0 %v68
    %103 = vmatpush.msra.mxu0 %v67
    %104 = vmatpush.msra.mxu0 %v66
    %105 = vmatmul.f32.gmra.mxu0 %v84
    %v106 = vpop.f32.mrf.mxu0
    %v107 = vadd.f32 %v80, %v106
    %108 = vmatmul.f32.gmra.mxu0 %v87
    %v109 = vpop.f32.mrf.mxu0
    %v110 = vadd.f32 %v80, %v109
    %111 = vdwg.mxu0
    %vm112 = vcmask 130048
    %113 = vst.msk [vmem:[#allocation2] sm:$0xff] %vm112, %v107
    %114 = vst.msk [vmem:[#allocation2 + $0x8] sm:$0xff] %vm112, %v110
    // Predicated region
    $region22: #{tpu_custom_call.1} parent=1 // pred_check
      _
    $region23: #{tpu_custom_call.1} parent=1 // pred_check_branch
      %116 = sbr.rel (0) target = $region25
    $region24: #{tpu_custom_call.1} parent=1 // pred_region
      %118 = vsyncadd [#allocation3], 0
      %s119 = sshll.u32 [#allocation2], 4
      %s120 = int_to_ptr.vmem [resolvable:$true] %s119
      %s121 = sshll.u32 %s5, 4
      %s122 = int_to_ptr.hbm [resolvable:$true] %s121
      %127 = dma.vmem_to_hbm [thread:$0]  %s120, 256, %s122, [#allocation3], 128, 128, 8
    $region25: #{tpu_custom_call.1} parent=1 // pred_fallthru
      _
    // Predicated region
    $region26: #{tpu_custom_call.1} parent=1 // pred_check
      _
    $region27: #{tpu_custom_call.1} parent=1 // pred_check_branch
      %129 = sbr.rel (0) target = $region29
    $region28: #{tpu_custom_call.1} parent=1 // pred_region
      %131 = dma.done [#allocation3], 256
    $region29: #{tpu_custom_call.1} parent=1 // pred_fallthru
      _
    %132 = vsyncpa [#allocation3], 1

</llo_original>
